<compile_context>
chip_gen: v6e
topology: v6e:2x2x1
jax: 0.10.0
libtpu: 0.0.40
codegen_flags: <defaults>
</compile_context>

<pallas_src>
import functools
import math

import jax
import jax.numpy as jnp
from jax.experimental import pallas as pl
from jax.experimental.pallas import tpu as pltpu


# ---------------------------------------------------------------------------
# helpers
# ---------------------------------------------------------------------------
def _round_up(v, m):
    return (v + m - 1) // m * m


def _pad2d(arr, rows, cols):
    pr, pc = rows - arr.shape[0], cols - arr.shape[1]
    if pr or pc:
        arr = jnp.pad(arr, ((0, pr), (0, pc)))
    return arr


_VMEM_LIMIT = 32 * 1024 * 1024       # safe scoped-VMEM on v5e/v6e/v7x
_RESIDENT_BUDGET = 28 * 1024 * 1024  # headroom under the limit for resident B


def _node_tile(n):
    """Tile / padded extent along the node axis of the (N, N) adjacency."""
    n128 = _round_up(n, 128)
    if n128 <= 512:
        return n128, n128                     # one tile covers the whole axis
    if n == n128:
        # already aligned: pick the largest tile that divides -> zero padding
        for t in (512, 256, 128):
            if n128 % t == 0:
                return t, n128
    # padding needed anyway: pad to 256 (bounded waste), bump to 512 if it fits
    np_ = _round_up(n, 256)
    return (512 if np_ % 512 == 0 else 256), np_


def _col_tile(d):
    """Tile / padded extent along the out_dim axis (lane-dense, usually 1 tile)."""
    dp = _round_up(d, 128)
    if dp <= 512:
        return dp, dp                         # single tile -> j grid axis is size 1
    for t in (512, 256, 128):
        if dp % t == 0:
            return t, dp
    return 128, dp


# ---------------------------------------------------------------------------
# kernels
# ---------------------------------------------------------------------------
def _xw_kernel(x_ref, w_ref, o_ref):
    # support = x @ W.  Single K block per grid step: no accumulator scratch,
    # no pl.when init/finalize.  f32 in / f32 out (keeps support full precision
    # for the second matmul).
    o_ref[...] = jnp.dot(
        x_ref[...], w_ref[...], preferred_element_type=jnp.float32
    ).astype(o_ref.dtype)


def _agg_kernel_resident(tk, adj_ref, sup_ref, o_ref):
    # out = adj @ support with support fully VMEM-resident along K.
    # adj is streamed as f32 and cast to bf16 per tile (no boundary cast pass);
    # accumulation goes straight into the f32 output block.
    k = pl.program_id(2)

    @pl.when(k == 0)
    def _():
        o_ref[...] = jnp.zeros_like(o_ref)

    start = pl.multiple_of(k * tk, tk)
    a = adj_ref[...].astype(jnp.bfloat16)
    b = sup_ref[pl.ds(start, tk), :].astype(jnp.bfloat16)
    o_ref[...] += jnp.dot(a, b, preferred_element_type=jnp.float32)


def _agg_kernel_stream(adj_ref, sup_ref, o_ref):
    # Fallback when the resident support block would not fit the VMEM budget
    # (very large graphs): stream (tk, tn) support tiles per K step instead.
    k = pl.program_id(2)

    @pl.when(k == 0)
    def _():
        o_ref[...] = jnp.zeros_like(o_ref)

    o_ref[...] += jnp.dot(
        adj_ref[...].astype(jnp.bfloat16),
        sup_ref[...].astype(jnp.bfloat16),
        preferred_element_type=jnp.float32,
    )


# ---------------------------------------------------------------------------
# GraphConvolution.forward:  support = x @ W ; out = adj @ support
# ---------------------------------------------------------------------------
def graph_convolution_forward(x, adj, weight):
    n, in_dim = x.shape
    assert adj.shape == (n, n), f"adj must be (N, N), got {adj.shape}"
    in_dim2, out_dim = weight.shape
    assert in_dim == in_dim2, f"dim mismatch: {in_dim} vs {in_dim2}"

    t_node, n_p = _node_tile(n)               # node-axis tile & padded extent
    k_in_p = _round_up(in_dim, 128)
    t_out, out_dim_p = _col_tile(out_dim)

    x_p = _pad2d(x.astype(jnp.float32), n_p, k_in_p)
    w_p = _pad2d(weight.astype(jnp.float32), k_in_p, out_dim_p)
    adj_p = _pad2d(adj.astype(jnp.float32), n_p, n_p)

    # -------- support = x @ W  (small, per-call-overhead dominated) --------
    support = pl.pallas_call(
        _xw_kernel,
        out_shape=jax.ShapeDtypeStruct((n_p, out_dim_p), jnp.float32),
        grid_spec=pltpu.PrefetchScalarGridSpec(
            num_scalar_prefetch=0,
            grid=(n_p // t_node,),
            in_specs=[
                pl.BlockSpec((t_node, k_in_p), lambda i: (i, 0)),
                pl.BlockSpec((k_in_p, out_dim_p), lambda i: (0, 0)),  # resident W
            ],
            out_specs=pl.BlockSpec((t_node, out_dim_p), lambda i: (i, 0)),
        ),
        compiler_params=pltpu.CompilerParams(
            dimension_semantics=("parallel",),
            vmem_limit_bytes=_VMEM_LIMIT,
        ),
        cost_estimate=pl.CostEstimate(
            flops=2 * n_p * k_in_p * out_dim_p,
            transcendentals=0,
            bytes_accessed=4 * (n_p * k_in_p + k_in_p * out_dim_p + n_p * out_dim_p),
        ),
    )(x_p, w_p)

    # -------- out = adj @ support  (HBM-bandwidth bound) --------------------
    grid = (n_p // t_node, out_dim_p // t_out, n_p // t_node)  # K (reduction) last

    # VMEM plan for the resident-support path (count everything double-buffered):
    resident_bytes = (
        2 * n_p * t_out * 4            # resident support column slab (f32)
        + 2 * t_node * t_node * 4      # streamed adj tiles (f32)
        + 2 * t_node * t_out * 4       # f32 output tiles
    )
    use_resident = resident_bytes <= _RESIDENT_BUDGET

    if use_resident:
        agg_kernel = functools.partial(_agg_kernel_resident, t_node)
        sup_spec = pl.BlockSpec((n_p, t_out), lambda i, j, k: (0, j))
        sup_bytes = n_p * out_dim_p * 4                       # loaded once
    else:
        agg_kernel = _agg_kernel_stream
        sup_spec = pl.BlockSpec((t_node, t_out), lambda i, j, k: (k, j))
        sup_bytes = (n_p // t_node) * n_p * out_dim_p * 4     # re-streamed per row tile

    out_pad = pl.pallas_call(
        agg_kernel,
        out_shape=jax.ShapeDtypeStruct((n_p, out_dim_p), jnp.float32),
        grid_spec=pltpu.PrefetchScalarGridSpec(
            num_scalar_prefetch=0,
            grid=grid,
            in_specs=[
                pl.BlockSpec((t_node, t_node), lambda i, j, k: (i, k)),  # adj f32
                sup_spec,
            ],
            out_specs=pl.BlockSpec((t_node, t_out), lambda i, j, k: (i, j)),
        ),
        compiler_params=pltpu.CompilerParams(
            dimension_semantics=("parallel", "parallel", "arbitrary"),
            vmem_limit_bytes=_VMEM_LIMIT,
        ),
        cost_estimate=pl.CostEstimate(
            flops=2 * n_p * n_p * out_dim_p,
            transcendentals=0,
            bytes_accessed=n_p * n_p * 4 + sup_bytes + n_p * out_dim_p * 4,
        ),
    )(adj_p, support)

    # NOTE: self.bias is declared by the PyTorch module but never added in
    # forward(), so it is intentionally omitted here as well.
    return out_pad[:n, :out_dim]


# ---------------------------------------------------------------------------
# torch.nn.init.xavier_uniform_ with gain=sqrt(2): U(-a, a),
# a = gain * sqrt(6 / (fan_in + fan_out)).
# ---------------------------------------------------------------------------
def xavier_uniform(key, fan_in, fan_out, gain):
    a = gain * math.sqrt(6.0 / (fan_in + fan_out))
    return jax.random.uniform(
        key, (fan_in, fan_out), dtype=jnp.float32, minval=-a, maxval=a
    )


if __name__ == "__main__":
    # Small but non-trivial shapes: exercises zero-padding, the single-tile
    # out_dim axis, the resident-support path and the trailing K grid axis.
    N, IN_DIM, OUT_DIM = 200, 96, 64
    gain = math.sqrt(2.0)

    key = jax.random.PRNGKey(0)
    kx, kadj, kw = jax.random.split(key, 3)

    x = jax.random.normal(kx, (N, IN_DIM), dtype=jnp.float32)
    # Symmetric row-normalized dense adjacency-like matrix.
    a = jax.random.uniform(kadj, (N, N), dtype=jnp.float32)
    adj = (a + a.T) * 0.5
    adj = adj / jnp.sum(adj, axis=1, keepdims=True)

    weight = xavier_uniform(kw, IN_DIM, OUT_DIM, gain)

    out = graph_convolution_forward(x, adj, weight)
    out = jax.block_until_ready(out)

    # f32 reference for the exact module semantics: adj @ (x @ W).
    ref = adj @ (x @ weight)
    assert out.shape == (N, OUT_DIM)
    max_err = float(jnp.max(jnp.abs(out - ref)))
    # adj is cast to bf16 in-kernel (support stays f32): loose tolerance vs f32 ref.
    assert jnp.allclose(out, ref, atol=2e-2, rtol=2e-2), (
        f"mismatch vs reference: max abs err {max_err}"
    )

    print("KERNEL_OK")
</pallas_src>

<mosaic_0001>
module attributes {stable_mosaic.version = 11 : i64} {
  func.func @_xw_kernel(%arg0: i32, %arg1: memref<256x128xf32, #tpu.memory_space<vmem>>, %arg2: memref<128x128xf32, #tpu.memory_space<vmem>>, %arg3: memref<256x128xf32, #tpu.memory_space<vmem>>) attributes {dimension_semantics = [#tpu.dimension_semantics<parallel>], iteration_bounds = array<i64: 1>, scalar_prefetch = 0 : i64, scratch_operands = 0 : i64, tpu.core_type = #tpu.core_type<tc>, window_params = [{transform_indices = @transform_0, window_bounds = array<i64: 256, 128>}, {pipeline_mode = #tpu.pipeline_mode<synchronous>, transform_indices = @transform_1, window_bounds = array<i64: 128, 128>}, {transform_indices = @transform_2, window_bounds = array<i64: 256, 128>}]} {
    %c0 = arith.constant 0 : index
    %c0_0 = arith.constant 0 : index
    %0 = vector.load %arg1[%c0, %c0_0] : memref<256x128xf32, #tpu.memory_space<vmem>>, vector<256x128xf32>
    %c0_1 = arith.constant 0 : index
    %c0_2 = arith.constant 0 : index
    %1 = vector.load %arg2[%c0_1, %c0_2] : memref<128x128xf32, #tpu.memory_space<vmem>>, vector<128x128xf32>
    %cst = arith.constant dense<0.000000e+00> : vector<256x128xf32>
    %2 = tpu.matmul %0, %1, %cst {dimension_numbers = #tpu.dot_dimension_numbers<[1], [0], [0], [1], [0, 0, 1, 1], [], []>} : vector<256x128xf32>, vector<128x128xf32>, vector<256x128xf32> -> vector<256x128xf32>
    %c0_3 = arith.constant 0 : index
    %c0_4 = arith.constant 0 : index
    %3 = vector.load %arg3[%c0_3, %c0_4] : memref<256x128xf32, #tpu.memory_space<vmem>>, vector<256x128xf32>
    tpu.vector_store %arg3[%c0_3, %c0_4], %2 {strides = array<i32>} : memref<256x128xf32, #tpu.memory_space<vmem>>, vector<256x128xf32>,
    return
  }
  func.func @transform_0(%arg0: i32) -> (i32, i32) {
    %c0_i32 = arith.constant 0 : i32
    %c0_i32_0 = arith.constant 0 : i32
    return %arg0, %c0_i32 : i32, i32
  }
  func.func @transform_1(%arg0: i32) -> (i32, i32) {
    %c0_i32 = arith.constant 0 : i32
    %c0_i32_0 = arith.constant 0 : i32
    %c0_i32_1 = arith.constant 0 : i32
    return %c0_i32, %c0_i32_0 : i32, i32
  }
  func.func @transform_2(%arg0: i32) -> (i32, i32) {
    %c0_i32 = arith.constant 0 : i32
    %c0_i32_0 = arith.constant 0 : i32
    return %arg0, %c0_i32 : i32, i32
  }
}

</mosaic_0001>

<llo_original>
// kernel: tpu_custom_call.1
$region0: #{tpu_custom_call.1}
  #allocation0 [shape = 'u32[]', space=smem, size = 0x4, offset = 0x4, fixed_abs, tag = 'smem constant byte address 0x4 - core index']
  #allocation1 [shape = 'u32[144,128]{1,0:T(1,128)}', space=vmem, size = 0x12000, scoped, tag = 'internal scratch']
  %s0 = inlined_call_operand.hbm [shape: f32[256,128], index: 0, kind: input, shape index: {}]
  %s1 = inlined_call_operand.hbm [shape: f32[128,128], index: 1, kind: input, shape index: {}]
  %s2 = inlined_call_operand.hbm [shape: f32[256,128], index: 2, kind: output, shape index: {}]
  %s3 = sld [smem:[#allocation0]]
  $region26: #{tpu_custom_call.1} parent=0
    _
  %s5 = ssub.s32 1, %s3
  %s6 = scalar_select 0, %s5, %s3
  $region1: #{tpu_custom_call.1} parent=0
    #allocation2 [shape = 'u8[131072]{0}', space=vmem, size = 0x20000, scoped, tag = 'input window, operand 0, single buffered']
    #allocation3 [shape = 's32[1]{0}', space=sflag, size = 0x4, scoped, tag = 'scoped memory for tpu_custom_call.1']
    #allocation4 [shape = 's32[1]{0}', space=sflag, size = 0x4, scoped, tag = 'scoped memory for tpu_custom_call.1']
    #allocation5 [shape = 'u8[65536]{0}', space=vmem, size = 0x10000, scoped, tag = 'input window, operand 1, single buffered']
    #allocation6 [shape = 's32[1]{0}', space=sflag, size = 0x4, scoped, tag = 'scoped memory for tpu_custom_call.1']
    #allocation7 [shape = 'u8[131072]{0}', space=vmem, size = 0x20000, scoped, tag = 'output window, operand 0, single buffered']
    %7 = vsyncpa [#allocation3], 0
    %8 = vsyncpa [#allocation6], 0
    %9 = vsyncpa [#allocation4], 0
    // Predicated region
    $region2: #{tpu_custom_call.1} parent=1 // pred_check
      _
    $region3: #{tpu_custom_call.1} parent=1 // pred_check_branch
      %11 = sbr.rel (0) target = $region5
    $region4: #{tpu_custom_call.1} parent=1 // pred_region
      %s13 = ssub.s32 4096, 4096
      %14 = vsyncadd [#allocation3], %s13
      %s15 = sshll.u32 [#allocation2], 4
      %s16 = int_to_ptr.vmem [resolvable:$true] %s15
      %21 = dma.hbm_to_vmem [thread:$0]  %s0, 4096, %s16, [#allocation3], 128, 128, 8
    $region5: #{tpu_custom_call.1} parent=1 // pred_fallthru
      _
    // Predicated region
    $region6: #{tpu_custom_call.1} parent=1 // pred_check
      _
    $region7: #{tpu_custom_call.1} parent=1 // pred_check_branch
      %23 = sbr.rel (0) target = $region9
    $region8: #{tpu_custom_call.1} parent=1 // pred_region
      %s25 = ssub.s32 2048, 2048
      %26 = vsyncadd [#allocation6], %s25
      %s27 = sshll.u32 [#allocation5], 4
      %s28 = int_to_ptr.vmem [resolvable:$true] %s27
      %33 = dma.hbm_to_vmem [thread:$0]  %s1, 2048, %s28, [#allocation6], 128, 128, 8
    $region9: #{tpu_custom_call.1} parent=1 // pred_fallthru
      _
    // Predicated region
    $region10: #{tpu_custom_call.1} parent=1 // pred_check
      _
    $region11: #{tpu_custom_call.1} parent=1 // pred_check_branch
      %35 = sbr.rel (0) target = $region13
    $region12: #{tpu_custom_call.1} parent=1 // pred_region
      %36 = dma.done [#allocation3], 4096
    $region13: #{tpu_custom_call.1} parent=1 // pred_fallthru
      _
    // Predicated region
    $region14: #{tpu_custom_call.1} parent=1 // pred_check
      _
    $region15: #{tpu_custom_call.1} parent=1 // pred_check_branch
      %38 = sbr.rel (0) target = $region17
    $region16: #{tpu_custom_call.1} parent=1 // pred_region
      %39 = dma.done [#allocation6], 2048
    $region17: #{tpu_custom_call.1} parent=1 // pred_fallthru
      _
    %v40 = vld [vmem:[#allocation2] sm:$0xff]
    %v41 = vld [vmem:[#allocation2 + $0x8] sm:$0xff]
    %v42 = vld [vmem:[#allocation2 + $0x10] sm:$0xff]
    %v43 = vld [vmem:[#allocation2 + $0x18] sm:$0xff]
    %v44 = vld [vmem:[#allocation2 + $0x20] sm:$0xff]
    %v45 = vld [vmem:[#allocation2 + $0x28] sm:$0xff]
    %v46 = vld [vmem:[#allocation2 + $0x30] sm:$0xff]
    %v47 = vld [vmem:[#allocation2 + $0x38] sm:$0xff]
    %v48 = vld [vmem:[#allocation2 + $0x40] sm:$0xff]
    %v49 = vld [vmem:[#allocation2 + $0x48] sm:$0xff]
    %v50 = vld [vmem:[#allocation2 + $0x50] sm:$0xff]
    %v51 = vld [vmem:[#allocation2 + $0x58] sm:$0xff]
    %v52 = vld [vmem:[#allocation2 + $0x60] sm:$0xff]
    %v53 = vld [vmem:[#allocation2 + $0x68] sm:$0xff]
    %v54 = vld [vmem:[#allocation2 + $0x70] sm:$0xff]
    %v55 = vld [vmem:[#allocation2 + $0x78] sm:$0xff]
    %v56 = vld [vmem:[#allocation2 + $0x80] sm:$0xff]
    %v57 = vld [vmem:[#allocation2 + $0x88] sm:$0xff]
    %v58 = vld [vmem:[#allocation2 + $0x90] sm:$0xff]
    %v59 = vld [vmem:[#allocation2 + $0x98] sm:$0xff]
    %v60 = vld [vmem:[#allocation2 + $0xa0] sm:$0xff]
    %v61 = vld [vmem:[#allocation2 + $0xa8] sm:$0xff]
    %v62 = vld [vmem:[#allocation2 + $0xb0] sm:$0xff]
    %v63 = vld [vmem:[#allocation2 + $0xb8] sm:$0xff]
    %v64 = vld [vmem:[#allocation2 + $0xc0] sm:$0xff]
    %v65 = vld [vmem:[#allocation2 + $0xc8] sm:$0xff]
    %v66 = vld [vmem:[#allocation2 + $0xd0] sm:$0xff]
    %v67 = vld [vmem:[#allocation2 + $0xd8] sm:$0xff]
    %v68 = vld [vmem:[#allocation2 + $0xe0] sm:$0xff]
    %v69 = vld [vmem:[#allocation2 + $0xe8] sm:$0xff]
    %v70 = vld [vmem:[#allocation2 + $0xf0] sm:$0xff]
    %v71 = vld [vmem:[#allocation2 + $0xf8] sm:$0xff]
    %v72 = vld [vmem:[#allocation5] sm:$0xff]
    %v73 = vld [vmem:[#allocation5 + $0x8] sm:$0xff]
    %v74 = vld [vmem:[#allocation5 + $0x10] sm:$0xff]
    %v75 = vld [vmem:[#allocation5 + $0x18] sm:$0xff]
    %v76 = vld [vmem:[#allocation5 + $0x20] sm:$0xff]
    %v77 = vld [vmem:[#allocation5 + $0x28] sm:$0xff]
    %v78 = vld [vmem:[#allocation5 + $0x30] sm:$0xff]
    %v79 = vld [vmem:[#allocation5 + $0x38] sm:$0xff]
    %v80 = vld [vmem:[#allocation5 + $0x40] sm:$0xff]
    %v81 = vld [vmem:[#allocation5 + $0x48] sm:$0xff]
    %v82 = vld [vmem:[#allocation5 + $0x50] sm:$0xff]
    %v83 = vld [vmem:[#allocation5 + $0x58] sm:$0xff]
    %v84 = vld [vmem:[#allocation5 + $0x60] sm:$0xff]
    %v85 = vld [vmem:[#allocation5 + $0x68] sm:$0xff]
    %v86 = vld [vmem:[#allocation5 + $0x70] sm:$0xff]
    %v87 = vld [vmem:[#allocation5 + $0x78] sm:$0xff]
    %88 = vmatprep.subr.mxu0 0.0
    %89 = vmatpush1.msra.mxu0 %v87
    %90 = vmatprep.subr.mxu0 0.0
    %91 = vmatpush1.msra.mxu0 %v86
    %92 = vmatprep.subr.mxu0 0.0
    %93 = vmatpush1.msra.mxu0 %v85
    %94 = vmatprep.subr.mxu0 0.0
    %95 = vmatpush1.msra.mxu0 %v84
    %96 = vmatprep.subr.mxu0 0.0
    %97 = vmatpush1.msra.mxu0 %v83
    %98 = vmatprep.subr.mxu0 0.0
    %99 = vmatpush1.msra.mxu0 %v82
    %100 = vmatprep.subr.mxu0 0.0
    %101 = vmatpush1.msra.mxu0 %v81
    %102 = vmatprep.subr.mxu0 0.0
    %103 = vmatpush1.msra.mxu0 %v80
    %104 = vmatprep.subr.mxu0 0.0
    %105 = vmatpush1.msra.mxu0 %v79
    %106 = vmatprep.subr.mxu0 0.0
    %107 = vmatpush1.msra.mxu0 %v78
    %108 = vmatprep.subr.mxu0 0.0
    %109 = vmatpush1.msra.mxu0 %v77
    %110 = vmatprep.subr.mxu0 0.0
    %111 = vmatpush1.msra.mxu0 %v76
    %112 = vmatprep.subr.mxu0 0.0
    %113 = vmatpush1.msra.mxu0 %v75
    %114 = vmatprep.subr.mxu0 0.0
    %115 = vmatpush1.msra.mxu0 %v74
    %116 = vmatprep.subr.mxu0 0.0
    %117 = vmatpush1.msra.mxu0 %v73
    %118 = vmatprep.subr.mxu0 0.0
    %119 = vmatpush1.msra.mxu0 %v72
    %120 = vmatprep.subr.mxu0 0.0
    %121 = vmatpush2.msra.mxu0 0.0
    %122 = vmatprep.subr.mxu0 0.0
    %123 = vmatpush2.msra.mxu0 0.0
    %124 = vmatprep.subr.mxu0 0.0
    %125 = vmatpush2.msra.mxu0 0.0
    %126 = vmatprep.subr.mxu0 0.0
    %127 = vmatpush2.msra.mxu0 0.0
    %128 = vmatprep.subr.mxu0 0.0
    %129 = vmatpush2.msra.mxu0 0.0
    %130 = vmatprep.subr.mxu0 0.0
    %131 = vmatpush2.msra.mxu0 0.0
    %132 = vmatprep.subr.mxu0 0.0
    %133 = vmatpush2.msra.mxu0 0.0
    %134 = vmatprep.subr.mxu0 0.0
    %135 = vmatpush2.msra.mxu0 0.0
    %136 = vmatprep.subr.mxu0 0.0
    %137 = vmatpush2.msra.mxu0 0.0
    %138 = vmatprep.subr.mxu0 0.0
    %139 = vmatpush2.msra.mxu0 0.0
    %140 = vmatprep.subr.mxu0 0.0
    %141 = vmatpush2.msra.mxu0 0.0
    %142 = vmatprep.subr.mxu0 0.0
    %143 = vmatpush2.msra.mxu0 0.0
    %144 = vmatprep.subr.mxu0 0.0
    %145 = vmatpush2.msra.mxu0 0.0
    %146 = vmatprep.subr.mxu0 0.0
    %147 = vmatpush2.msra.mxu0 0.0
    %148 = vmatprep.subr.mxu0 0.0
    %149 = vmatpush2.msra.mxu0 0.0
    %150 = vmatprep.subr.mxu0 0.0
    %151 = vmatpush2.msra.mxu0 0.0
    %152 = vmatprep.mubr.f32.mxu0 0.0
    %153 = vmatmul.mubr.f32.gmra.mxu0 %v40
    %v154 = vpop.f32.mrf.mxu0
    %v155 = vadd.f32 0.0, %v154
    %v156 = vpop.f32.mrf.mxu0
    %157 = vmatprep.mubr.f32.mxu0 0.0
    %158 = vmatmul.mubr.f32.gmra.mxu0 %v41
    %v159 = vpop.f32.mrf.mxu0
    %v160 = vadd.f32 0.0, %v159
    %v161 = vpop.f32.mrf.mxu0
    %162 = vmatprep.mubr.f32.mxu0 0.0
    %163 = vmatmul.mubr.f32.gmra.mxu0 %v42
    %v164 = vpop.f32.mrf.mxu0
    %v165 = vadd.f32 0.0, %v164
    %v166 = vpop.f32.mrf.mxu0
    %167 = vmatprep.mubr.f32.mxu0 0.0
    %168 = vmatmul.mubr.f32.gmra.mxu0 %v43
    %v169 = vpop.f32.mrf.mxu0
    %v170 = vadd.f32 0.0, %v169
    %v171 = vpop.f32.mrf.mxu0
    %172 = vmatprep.mubr.f32.mxu0 0.0
    %173 = vmatmul.mubr.f32.gmra.mxu0 %v44
    %v174 = vpop.f32.mrf.mxu0
    %v175 = vadd.f32 0.0, %v174
    %v176 = vpop.f32.mrf.mxu0
    %177 = vmatprep.mubr.f32.mxu0 0.0
    %178 = vmatmul.mubr.f32.gmra.mxu0 %v45
    %v179 = vpop.f32.mrf.mxu0
    %v180 = vadd.f32 0.0, %v179
    %v181 = vpop.f32.mrf.mxu0
    %182 = vmatprep.mubr.f32.mxu0 0.0
    %183 = vmatmul.mubr.f32.gmra.mxu0 %v46
    %v184 = vpop.f32.mrf.mxu0
    %v185 = vadd.f32 0.0, %v184
    %v186 = vpop.f32.mrf.mxu0
    %187 = vmatprep.mubr.f32.mxu0 0.0
    %188 = vmatmul.mubr.f32.gmra.mxu0 %v47
    %v189 = vpop.f32.mrf.mxu0
    %v190 = vadd.f32 0.0, %v189
    %v191 = vpop.f32.mrf.mxu0
    %192 = vmatprep.mubr.f32.mxu0 0.0
    %193 = vmatmul.mubr.f32.gmra.mxu0 %v48
    %v194 = vpop.f32.mrf.mxu0
    %v195 = vadd.f32 0.0, %v194
    %v196 = vpop.f32.mrf.mxu0
    %197 = vmatprep.mubr.f32.mxu0 0.0
    %198 = vmatmul.mubr.f32.gmra.mxu0 %v49
    %v199 = vpop.f32.mrf.mxu0
    %v200 = vadd.f32 0.0, %v199
    %v201 = vpop.f32.mrf.mxu0
    %202 = vmatprep.mubr.f32.mxu0 0.0
    %203 = vmatmul.mubr.f32.gmra.mxu0 %v50
    %v204 = vpop.f32.mrf.mxu0
    %v205 = vadd.f32 0.0, %v204
    %v206 = vpop.f32.mrf.mxu0
    %207 = vmatprep.mubr.f32.mxu0 0.0
    %208 = vmatmul.mubr.f32.gmra.mxu0 %v51
    %v209 = vpop.f32.mrf.mxu0
    %v210 = vadd.f32 0.0, %v209
    %v211 = vpop.f32.mrf.mxu0
    %212 = vmatprep.mubr.f32.mxu0 0.0
    %213 = vmatmul.mubr.f32.gmra.mxu0 %v52
    %v214 = vpop.f32.mrf.mxu0
    %v215 = vadd.f32 0.0, %v214
    %v216 = vpop.f32.mrf.mxu0
    %217 = vmatprep.mubr.f32.mxu0 0.0
    %218 = vmatmul.mubr.f32.gmra.mxu0 %v53
    %v219 = vpop.f32.mrf.mxu0
    %v220 = vadd.f32 0.0, %v219
    %v221 = vpop.f32.mrf.mxu0
    %222 = vmatprep.mubr.f32.mxu0 0.0
    %223 = vmatmul.mubr.f32.gmra.mxu0 %v54
    %v224 = vpop.f32.mrf.mxu0
    %v225 = vadd.f32 0.0, %v224
    %v226 = vpop.f32.mrf.mxu0
    %227 = vmatprep.mubr.f32.mxu0 0.0
    %228 = vmatmul.mubr.f32.gmra.mxu0 %v55
    %v229 = vpop.f32.mrf.mxu0
    %v230 = vadd.f32 0.0, %v229
    %v231 = vpop.f32.mrf.mxu0
    %232 = vmatprep.mubr.f32.mxu0 0.0
    %233 = vmatmul.mubr.f32.gmra.mxu0 %v56
    %v234 = vpop.f32.mrf.mxu0
    %v235 = vadd.f32 0.0, %v234
    %v236 = vpop.f32.mrf.mxu0
    %237 = vmatprep.mubr.f32.mxu0 0.0
    %238 = vmatmul.mubr.f32.gmra.mxu0 %v57
    %v239 = vpop.f32.mrf.mxu0
    %v240 = vadd.f32 0.0, %v239
    %v241 = vpop.f32.mrf.mxu0
    %242 = vmatprep.mubr.f32.mxu0 0.0
    %243 = vmatmul.mubr.f32.gmra.mxu0 %v58
    %v244 = vpop.f32.mrf.mxu0
    %v245 = vadd.f32 0.0, %v244
    %v246 = vpop.f32.mrf.mxu0
    %247 = vmatprep.mubr.f32.mxu0 0.0
    %248 = vmatmul.mubr.f32.gmra.mxu0 %v59
    %v249 = vpop.f32.mrf.mxu0
    %v250 = vadd.f32 0.0, %v249
    %v251 = vpop.f32.mrf.mxu0
    %252 = vmatprep.mubr.f32.mxu0 0.0
    %253 = vmatmul.mubr.f32.gmra.mxu0 %v60
    %v254 = vpop.f32.mrf.mxu0
    %v255 = vadd.f32 0.0, %v254
    %v256 = vpop.f32.mrf.mxu0
    %257 = vmatprep.mubr.f32.mxu0 0.0
    %258 = vmatmul.mubr.f32.gmra.mxu0 %v61
    %v259 = vpop.f32.mrf.mxu0
    %v260 = vadd.f32 0.0, %v259
    %v261 = vpop.f32.mrf.mxu0
    %262 = vmatprep.mubr.f32.mxu0 0.0
    %263 = vmatmul.mubr.f32.gmra.mxu0 %v62
    %v264 = vpop.f32.mrf.mxu0
    %v265 = vadd.f32 0.0, %v264
    %v266 = vpop.f32.mrf.mxu0
    %267 = vmatprep.mubr.f32.mxu0 0.0
    %268 = vmatmul.mubr.f32.gmra.mxu0 %v63
    %v269 = vpop.f32.mrf.mxu0
    %v270 = vadd.f32 0.0, %v269
    %v271 = vpop.f32.mrf.mxu0
    %272 = vmatprep.mubr.f32.mxu0 0.0
    %273 = vmatmul.mubr.f32.gmra.mxu0 %v64
    %v274 = vpop.f32.mrf.mxu0
    %v275 = vadd.f32 0.0, %v274
    %v276 = vpop.f32.mrf.mxu0
    %277 = vmatprep.mubr.f32.mxu0 0.0
    %278 = vmatmul.mubr.f32.gmra.mxu0 %v65
    %v279 = vpop.f32.mrf.mxu0
    %v280 = vadd.f32 0.0, %v279
    %v281 = vpop.f32.mrf.mxu0
    %282 = vmatprep.mubr.f32.mxu0 0.0
    %283 = vmatmul.mubr.f32.gmra.mxu0 %v66
    %v284 = vpop.f32.mrf.mxu0
    %v285 = vadd.f32 0.0, %v284
    %v286 = vpop.f32.mrf.mxu0
    %287 = vmatprep.mubr.f32.mxu0 0.0
    %288 = vmatmul.mubr.f32.gmra.mxu0 %v67
    %v289 = vpop.f32.mrf.mxu0
    %v290 = vadd.f32 0.0, %v289
    %v291 = vpop.f32.mrf.mxu0
    %292 = vmatprep.mubr.f32.mxu0 0.0
    %293 = vmatmul.mubr.f32.gmra.mxu0 %v68
    %v294 = vpop.f32.mrf.mxu0
    %v295 = vadd.f32 0.0, %v294
    %v296 = vpop.f32.mrf.mxu0
    %297 = vmatprep.mubr.f32.mxu0 0.0
    %298 = vmatmul.mubr.f32.gmra.mxu0 %v69
    %v299 = vpop.f32.mrf.mxu0
    %v300 = vadd.f32 0.0, %v299
    %v301 = vpop.f32.mrf.mxu0
    %302 = vmatprep.mubr.f32.mxu0 0.0
    %303 = vmatmul.mubr.f32.gmra.mxu0 %v70
    %v304 = vpop.f32.mrf.mxu0
    %v305 = vadd.f32 0.0, %v304
    %v306 = vpop.f32.mrf.mxu0
    %307 = vmatprep.mubr.f32.mxu0 0.0
    %308 = vmatmul.mubr.f32.gmra.mxu0 %v71
    %v309 = vpop.f32.mrf.mxu0
    %v310 = vadd.f32 0.0, %v309
    %v311 = vpop.f32.mrf.mxu0
    %312 = vdwg.mxu0
    %313 = vst [vmem:[#allocation7] sm:$0xff] %v155
    %314 = vst [vmem:[#allocation7 + $0x8] sm:$0xff] %v160
    %315 = vst [vmem:[#allocation7 + $0x10] sm:$0xff] %v165
    %316 = vst [vmem:[#allocation7 + $0x18] sm:$0xff] %v170
    %317 = vst [vmem:[#allocation7 + $0x20] sm:$0xff] %v175
    %318 = vst [vmem:[#allocation7 + $0x28] sm:$0xff] %v180
    %319 = vst [vmem:[#allocation7 + $0x30] sm:$0xff] %v185
    %320 = vst [vmem:[#allocation7 + $0x38] sm:$0xff] %v190
    %321 = vst [vmem:[#allocation7 + $0x40] sm:$0xff] %v195
    %322 = vst [vmem:[#allocation7 + $0x48] sm:$0xff] %v200
    %323 = vst [vmem:[#allocation7 + $0x50] sm:$0xff] %v205
    %324 = vst [vmem:[#allocation7 + $0x58] sm:$0xff] %v210
    %325 = vst [vmem:[#allocation7 + $0x60] sm:$0xff] %v215
    %326 = vst [vmem:[#allocation7 + $0x68] sm:$0xff] %v220
    %327 = vst [vmem:[#allocation7 + $0x70] sm:$0xff] %v225
    %328 = vst [vmem:[#allocation7 + $0x78] sm:$0xff] %v230
    %329 = vst [vmem:[#allocation7 + $0x80] sm:$0xff] %v235
    %330 = vst [vmem:[#allocation7 + $0x88] sm:$0xff] %v240
    %331 = vst [vmem:[#allocation7 + $0x90] sm:$0xff] %v245
    %332 = vst [vmem:[#allocation7 + $0x98] sm:$0xff] %v250
    %333 = vst [vmem:[#allocation7 + $0xa0] sm:$0xff] %v255
    %334 = vst [vmem:[#allocation7 + $0xa8] sm:$0xff] %v260
    %335 = vst [vmem:[#allocation7 + $0xb0] sm:$0xff] %v265
    %336 = vst [vmem:[#allocation7 + $0xb8] sm:$0xff] %v270
    %337 = vst [vmem:[#allocation7 + $0xc0] sm:$0xff] %v275
    %338 = vst [vmem:[#allocation7 + $0xc8] sm:$0xff] %v280
    %339 = vst [vmem:[#allocation7 + $0xd0] sm:$0xff] %v285
    %340 = vst [vmem:[#allocation7 + $0xd8] sm:$0xff] %v290
    %341 = vst [vmem:[#allocation7 + $0xe0] sm:$0xff] %v295
    %342 = vst [vmem:[#allocation7 + $0xe8] sm:$0xff] %v300
    %343 = vst [vmem:[#allocation7 + $0xf0] sm:$0xff] %v305
    %344 = vst [vmem:[#allocation7 + $0xf8] sm:$0xff] %v310
    // Predicated region
    $region18: #{tpu_custom_call.1} parent=1 // pred_check
      _
    $region19: #{tpu_custom_call.1} parent=1 // pred_check_branch
      %346 = sbr.rel (0) target = $region21
    $region20: #{tpu_custom_call.1} parent=1 // pred_region
      %s348 = ssub.s32 4096, 4096
      %349 = vsyncadd [#allocation4], %s348
      %s350 = sshll.u32 [#allocation7], 4
      %s351 = int_to_ptr.vmem [resolvable:$true] %s350
      %356 = dma.vmem_to_hbm [thread:$0]  %s351, 4096, %s2, [#allocation4], 128, 128, 8
    $region21: #{tpu_custom_call.1} parent=1 // pred_fallthru
      _
    // Predicated region
    $region22: #{tpu_custom_call.1} parent=1 // pred_check
      _
    $region23: #{tpu_custom_call.1} parent=1 // pred_check_branch
      %358 = sbr.rel (0) target = $region25
    $region24: #{tpu_custom_call.1} parent=1 // pred_region
      %359 = dma.done [#allocation4], 4096
    $region25: #{tpu_custom_call.1} parent=1 // pred_fallthru
      _
    %360 = vsyncpa [#allocation3], 1
    %361 = vsyncpa [#allocation6], 1
    %362 = vsyncpa [#allocation4], 1

</llo_original>
